<compile_context>
chip_gen: v5e
topology: v5e:2x2
jax: 0.10.0
libtpu: 0.0.40
codegen_flags: <defaults>
</compile_context>

<pallas_src>
import numpy as np
import jax
import jax.numpy as jnp
from jax.experimental import pallas as pl
from jax.experimental.pallas import tpu as pltpu


# ----------------------------------------------------------------------------
# pe table (matches the PyTorch buffer construction)
# ----------------------------------------------------------------------------
def _build_pe_table(d_model: int, max_len: int = 500, dtype=jnp.float32):
    """Sinusoidal positional-encoding table, shape (max_len, d_model)."""
    d_pad = d_model + (d_model % 2)  # round up to even so sin/cos columns match
    position = jnp.arange(0, max_len, dtype=jnp.float32)[:, None]              # (L, 1)
    div_term = jnp.exp(
        jnp.arange(0, d_pad, 2, dtype=jnp.float32) * (-np.log(10000.0) / d_model)
    )                                                                           # (d_pad/2,)
    pe = jnp.zeros((max_len, d_pad), dtype=jnp.float32)
    pe = pe.at[:, 0::2].set(jnp.sin(position * div_term))
    pe = pe.at[:, 1::2].set(jnp.cos(position * div_term))
    return pe[:, :d_model].astype(dtype)


# ----------------------------------------------------------------------------
# Tiling heuristics
# ----------------------------------------------------------------------------
# ~4 MiB per x/out block: amortizes the ~0.35 us per-grid-step overhead on all
# generations (review: 2-4 MiB for v5e/v6e, 4-8 MiB for v7x — 4 MiB satisfies
# both while keeping 2x(x)+2x(out)+2x(pe) buffers well under every VMEM limit).
_DEFAULT_TARGET_BLOCK_BYTES = 4 * 1024 * 1024


def _divisors(n: int):
    return [d for d in range(1, n + 1) if n % d == 0]


def _choose_lane_fold(S: int, D: int, itemsize: int, target_bytes: int) -> int:
    """Pick k (divisor of S) so the lane axis C = k*D is >= 128 and ideally a
    multiple of 128 (unmasked stores), while one (1, C) row fits the budget."""
    divs = _divisors(S)
    fits = lambda k: k * D * itemsize <= target_bytes
    mult128 = [k for k in divs if (k * D) % 128 == 0 and fits(k)]
    if mult128:
        return mult128[0]
    ge128 = [k for k in divs if k * D >= 128 and fits(k)]
    if ge128:
        return ge128[0]
    # Degenerate (S*D tiny or nothing fits): fall back to the widest legal fold.
    return divs[-1] if fits(divs[-1]) else 1


def _choose_tiles(B: int, R: int, C: int, itemsize: int, target_bytes: int):
    """Pick (Bt, St): St a multiple of 8 (or the full R) dividing R, maximized
    under the byte target; grow Bt over batch only once a full (R, C) slab fits
    (so pe never has to repeat inside a block)."""
    row_bytes = C * itemsize
    st_cands = sorted({d for d in _divisors(R) if d % 8 == 0} | {R})
    St = st_cands[0]
    for d in st_cands:
        if d * row_bytes <= target_bytes:
            St = max(St, d)
    Bt = 1
    if St == R:
        for d in _divisors(B):
            if d * R * row_bytes <= target_bytes:
                Bt = max(Bt, d)
    return Bt, St


# ----------------------------------------------------------------------------
# Kernel
# ----------------------------------------------------------------------------
def _pe_add_kernel(x_ref, pe_ref, o_ref):
    # x_ref / o_ref : (Bt, St, C) lane-dense, sublane-filled tile.
    # pe_ref        : (1,  St, C) — resident across the inner (batch) grid loop;
    #                 broadcasts over the leading batch axis only (cheap).
    o_ref[...] = x_ref[...] + pe_ref[...]


# ----------------------------------------------------------------------------
# Wrapper
# ----------------------------------------------------------------------------
def positional_encoding_forward(
    x: jax.Array,
    pe_table: jax.Array,
    *,
    target_block_bytes: int = _DEFAULT_TARGET_BLOCK_BYTES,
    min_pallas_bytes: int = 256 * 1024,
    donate_x: bool = False,
) -> jax.Array:
    """x: (B, S, D)  ->  x + pe[:S]  (dropout = identity / eval mode)."""
    B, S, D = x.shape
    max_len, d_model = pe_table.shape
    if S > max_len:
        raise ValueError(f"sequence length S={S} exceeds positional table max_len={max_len}")
    if d_model != D:
        raise ValueError(f"d_model mismatch: x has D={D}, pe table has {d_model}")

    pe = pe_table[:S, :].astype(x.dtype)
    itemsize = np.dtype(x.dtype).itemsize
    total_bytes = B * S * D * itemsize

    # Tiny inputs: the fixed pallas_call launch/pipeline cost dominates; XLA's
    # fused add is strictly faster there.
    if total_bytes < min_pallas_bytes:
        return x + pe[None]

    # Fold (S, D) -> (R, C): C = k*D lane-dense, R = S//k sublane-friendly.
    k = _choose_lane_fold(S, D, itemsize, target_block_bytes)
    R, C = S // k, k * D
    x3 = x.reshape(B, R, C)            # free row-major reshape
    pe3 = pe.reshape(1, R, C)

    Bt, St = _choose_tiles(B, R, C, itemsize, target_block_bytes)
    # seq-tiles outer, batch-tiles inner -> pe block index constant across the
    # inner loop (stays resident; re-fetched only when the seq tile changes).
    grid = (R // St, B // Bt)

    block_bytes = Bt * St * C * itemsize
    pe_block_bytes = St * C * itemsize
    # 2x double-buffered x + 2x out + 2x pe + slack for compiler scratch;
    # clamp to 48 MiB (safe under v7x's 64 MiB physical, trivial on v5e/v6e).
    vmem_need = 4 * block_bytes + 2 * pe_block_bytes + (4 << 20)
    vmem_limit = int(min(max(vmem_need, 32 << 20), 48 << 20))

    cost = pl.CostEstimate(
        flops=B * S * D,                                  # one add per element
        transcendentals=0,
        bytes_accessed=(2 * B * S * D + S * D) * itemsize,  # read x, write out, read pe once
    )

    out = pl.pallas_call(
        _pe_add_kernel,
        out_shape=jax.ShapeDtypeStruct((B, R, C), x.dtype),
        grid_spec=pltpu.PrefetchScalarGridSpec(
            num_scalar_prefetch=0,
            grid=grid,
            in_specs=[
                pl.BlockSpec((Bt, St, C), lambda s, b: (b, s, 0)),
                pl.BlockSpec((1, St, C), lambda s, b: (0, s, 0)),
            ],
            out_specs=pl.BlockSpec((Bt, St, C), lambda s, b: (b, s, 0)),
        ),
        compiler_params=pltpu.CompilerParams(
            dimension_semantics=("parallel", "parallel"),
            vmem_limit_bytes=vmem_limit,
        ),
        cost_estimate=cost,
        input_output_aliases=({0: 0} if donate_x else {}),
    )(x3, pe3)

    return out.reshape(B, S, D)


# ----------------------------------------------------------------------------
# Demo / correctness check
# ----------------------------------------------------------------------------
if __name__ == "__main__":
    MAX_LEN = 500
    key = jax.random.PRNGKey(0)
    k1, k2 = jax.random.split(key)

    # 1) Small shape implied by the module: x is (batch, seq, d_model).
    #    Force the Pallas path (min_pallas_bytes=0) so the kernel is exercised.
    B, S, D = 2, 8, 32
    x = jax.random.normal(k1, (B, S, D), dtype=jnp.float32)
    pe_table = _build_pe_table(D, max_len=MAX_LEN, dtype=jnp.float32)
    out = jax.block_until_ready(
        positional_encoding_forward(x, pe_table, min_pallas_bytes=0)
    )
    ref = x + pe_table[None, :S, :]
    np.testing.assert_allclose(np.asarray(out), np.asarray(ref), rtol=1e-6, atol=1e-6)

    # 2) Slightly larger case with an artificially small block target to
    #    exercise the multi-step (seq x batch) grid and resident-pe indexing.
    B2, S2, D2 = 4, 256, 128
    x2 = jax.random.normal(k2, (B2, S2, D2), dtype=jnp.float32)
    pe_table2 = _build_pe_table(D2, max_len=MAX_LEN, dtype=jnp.float32)
    out2 = jax.block_until_ready(
        positional_encoding_forward(x2, pe_table2, target_block_bytes=64 * 1024)
    )
    ref2 = x2 + pe_table2[None, :S2, :]
    np.testing.assert_allclose(np.asarray(out2), np.asarray(ref2), rtol=1e-6, atol=1e-6)

    print("KERNEL_OK")
</pallas_src>

<mosaic_0001>
module attributes {stable_mosaic.version = 11 : i64} {
  func.func @_pe_add_kernel(%arg0: i32, %arg1: i32, %arg2: memref<2x2x128xf32, #tpu.memory_space<vmem>>, %arg3: memref<1x2x128xf32, #tpu.memory_space<vmem>>, %arg4: memref<2x2x128xf32, #tpu.memory_space<vmem>>) attributes {dimension_semantics = [#tpu.dimension_semantics<parallel>, #tpu.dimension_semantics<parallel>], iteration_bounds = array<i64: 1, 1>, scalar_prefetch = 0 : i64, scratch_operands = 0 : i64, tpu.core_type = #tpu.core_type<tc>, window_params = [{transform_indices = @transform_0, window_bounds = array<i64: 2, 2, 128>}, {transform_indices = @transform_1, window_bounds = array<i64: 1, 2, 128>}, {transform_indices = @transform_2, window_bounds = array<i64: 2, 2, 128>}]} {
    %c0 = arith.constant 0 : index
    %c0_0 = arith.constant 0 : index
    %c0_1 = arith.constant 0 : index
    %0 = vector.load %arg2[%c0, %c0_0, %c0_1] : memref<2x2x128xf32, #tpu.memory_space<vmem>>, vector<2x2x128xf32>
    %c0_2 = arith.constant 0 : index
    %c0_3 = arith.constant 0 : index
    %c0_4 = arith.constant 0 : index
    %1 = vector.load %arg3[%c0_2, %c0_3, %c0_4] : memref<1x2x128xf32, #tpu.memory_space<vmem>>, vector<1x2x128xf32>
    %2 = vector.broadcast %1 : vector<1x2x128xf32> to vector<2x2x128xf32>
    %3 = arith.addf %0, %2 : vector<2x2x128xf32>
    %c0_5 = arith.constant 0 : index
    %c0_6 = arith.constant 0 : index
    %c0_7 = arith.constant 0 : index
    %4 = vector.load %arg4[%c0_5, %c0_6, %c0_7] : memref<2x2x128xf32, #tpu.memory_space<vmem>>, vector<2x2x128xf32>
    tpu.vector_store %arg4[%c0_5, %c0_6, %c0_7], %3 {strides = array<i32>} : memref<2x2x128xf32, #tpu.memory_space<vmem>>, vector<2x2x128xf32>,
    return
  }
  func.func @transform_0(%arg0: i32, %arg1: i32) -> (i32, i32, i32) {
    %c0_i32 = arith.constant 0 : i32
    %c0_i32_0 = arith.constant 0 : i32
    return %arg1, %arg0, %c0_i32 : i32, i32, i32
  }
  func.func @transform_1(%arg0: i32, %arg1: i32) -> (i32, i32, i32) {
    %c0_i32 = arith.constant 0 : i32
    %c0_i32_0 = arith.constant 0 : i32
    %c0_i32_1 = arith.constant 0 : i32
    return %c0_i32, %arg0, %c0_i32_0 : i32, i32, i32
  }
  func.func @transform_2(%arg0: i32, %arg1: i32) -> (i32, i32, i32) {
    %c0_i32 = arith.constant 0 : i32
    %c0_i32_0 = arith.constant 0 : i32
    return %arg1, %arg0, %c0_i32 : i32, i32, i32
  }
}

</mosaic_0001>

<llo_original>
// kernel: tpu_custom_call.1
$region0: #{tpu_custom_call.1}
  #allocation0 [shape = 'u32[]', space=smem, size = 0x4, offset = 0x4, fixed_abs, tag = 'smem constant byte address 0x4 - core index']
  #allocation1 [shape = 'u32[72,128]{1,0:T(1,128)}', space=vmem, size = 0x9000, scoped, tag = 'internal scratch']
  %s0 = inlined_call_operand.hbm [shape: f32[2,2,128], index: 0, kind: input, shape index: {}]
  %s1 = inlined_call_operand.hbm [shape: f32[1,2,128], index: 1, kind: input, shape index: {}]
  %s2 = inlined_call_operand.hbm [shape: f32[2,2,128], index: 2, kind: output, shape index: {}]
  %s3 = sld [smem:[#allocation0]]
  $region26: #{tpu_custom_call.1} parent=0
    _
  %s5 = ssub.s32 1, %s3
  %s6 = scalar_select 0, %s5, %s3
  $region1: #{tpu_custom_call.1} parent=0
    #allocation2 [shape = 'u8[2048]{0}', space=vmem, size = 0x800, scoped, tag = 'input window, operand 0, single buffered']
    #allocation3 [shape = 's32[1]{0}', space=sflag, size = 0x4, scoped, tag = 'scoped memory for tpu_custom_call.1']
    #allocation4 [shape = 's32[1]{0}', space=sflag, size = 0x4, scoped, tag = 'scoped memory for tpu_custom_call.1']
    #allocation5 [shape = 'u8[1024]{0}', space=vmem, size = 0x400, scoped, tag = 'input window, operand 1, single buffered']
    #allocation6 [shape = 's32[1]{0}', space=sflag, size = 0x4, scoped, tag = 'scoped memory for tpu_custom_call.1']
    #allocation7 [shape = 'u8[2048]{0}', space=vmem, size = 0x800, scoped, tag = 'output window, operand 0, single buffered']
    %7 = vsyncpa [#allocation3], 0
    %8 = vsyncpa [#allocation6], 0
    %9 = vsyncpa [#allocation4], 0
    // Predicated region
    $region2: #{tpu_custom_call.1} parent=1 // pred_check
      _
    $region3: #{tpu_custom_call.1} parent=1 // pred_check_branch
      %11 = sbr.rel (0) target = $region5
    $region4: #{tpu_custom_call.1} parent=1 // pred_region
      %13 = vsyncadd [#allocation3], 0
      %s14 = sshll.u32 %s0, 4
      %s15 = int_to_ptr.hbm [resolvable:$true] %s14
      %s16 = sshll.u32 [#allocation2], 4
      %s17 = int_to_ptr.vmem [resolvable:$true] %s16
      %22 = dma.hbm_to_vmem [thread:$0]  %s15, 64, %s17, [#allocation3], 32, 32, 2
    $region5: #{tpu_custom_call.1} parent=1 // pred_fallthru
      _
    // Predicated region
    $region6: #{tpu_custom_call.1} parent=1 // pred_check
      _
    $region7: #{tpu_custom_call.1} parent=1 // pred_check_branch
      %24 = sbr.rel (0) target = $region9
    $region8: #{tpu_custom_call.1} parent=1 // pred_region
      %26 = vsyncadd [#allocation6], 0
      %s28 = sshll.u32 %s1, 4
      %s29 = int_to_ptr.hbm [resolvable:$true] %s28
      %s30 = sshll.u32 [#allocation5], 4
      %s31 = int_to_ptr.vmem [resolvable:$true] %s30
      %33 = dma.hbm_to_vmem [thread:$0]  %s29, 32, %s31, [#allocation6]
    $region9: #{tpu_custom_call.1} parent=1 // pred_fallthru
      _
    // Predicated region
    $region10: #{tpu_custom_call.1} parent=1 // pred_check
      _
    $region11: #{tpu_custom_call.1} parent=1 // pred_check_branch
      %35 = sbr.rel (0) target = $region13
    $region12: #{tpu_custom_call.1} parent=1 // pred_region
      %37 = dma.done [#allocation3], 64
    $region13: #{tpu_custom_call.1} parent=1 // pred_fallthru
      _
    // Predicated region
    $region14: #{tpu_custom_call.1} parent=1 // pred_check
      _
    $region15: #{tpu_custom_call.1} parent=1 // pred_check_branch
      %39 = sbr.rel (0) target = $region17
    $region16: #{tpu_custom_call.1} parent=1 // pred_region
      %41 = dma.done [#allocation6], 32
    $region17: #{tpu_custom_call.1} parent=1 // pred_fallthru
      _
    %v42 = vld [vmem:[#allocation2] sm:$0x3]
    %v43 = vld [vmem:[#allocation2 + $0x2] sm:$0x3]
    %v44 = vld [vmem:[#allocation5] sm:$0x3]
    %v45 = vadd.f32 %v42, %v44
    %v46 = vadd.f32 %v43, %v44
    %47 = vst [vmem:[#allocation7] sm:$0x3] %v45
    %48 = vst [vmem:[#allocation7 + $0x2] sm:$0x3] %v46
    // Predicated region
    $region18: #{tpu_custom_call.1} parent=1 // pred_check
      _
    $region19: #{tpu_custom_call.1} parent=1 // pred_check_branch
      %50 = sbr.rel (0) target = $region21
    $region20: #{tpu_custom_call.1} parent=1 // pred_region
      %52 = vsyncadd [#allocation4], 0
      %s53 = sshll.u32 [#allocation7], 4
      %s54 = int_to_ptr.vmem [resolvable:$true] %s53
      %s55 = sshll.u32 %s2, 4
      %s56 = int_to_ptr.hbm [resolvable:$true] %s55
      %61 = dma.vmem_to_hbm [thread:$0]  %s54, 64, %s56, [#allocation4], 32, 32, 2
    $region21: #{tpu_custom_call.1} parent=1 // pred_fallthru
      _
    // Predicated region
    $region22: #{tpu_custom_call.1} parent=1 // pred_check
      _
    $region23: #{tpu_custom_call.1} parent=1 // pred_check_branch
      %63 = sbr.rel (0) target = $region25
    $region24: #{tpu_custom_call.1} parent=1 // pred_region
      %65 = dma.done [#allocation4], 64
    $region25: #{tpu_custom_call.1} parent=1 // pred_fallthru
      _
    %66 = vsyncpa [#allocation3], 1
    %67 = vsyncpa [#allocation6], 1
    %68 = vsyncpa [#allocation4], 1

</llo_original>
